<compile_context>
chip_gen: v5e
topology: v5e:2x2
jax: 0.10.0
libtpu: 0.0.40
codegen_flags: <defaults>
</compile_context>

<pallas_src>
import jax
import jax.numpy as jnp
from jax.experimental import pallas as pl
from jax.experimental.pallas import tpu as pltpu


_VMEM_BUDGET_BYTES = 40 * 1024 * 1024   # target working set; fits v7x's 64 MiB VMEM
_VMEM_LIMIT_BYTES = 48 * 1024 * 1024    # scoped limit: > 16/32 MiB default, < v7x physical


def _round_up(x, m):
    return ((x + m - 1) // m) * m


def _mlp_kernel(x_ref, w1_ref, w2_ref, w3_ref, o_ref):
    # Fused 3-layer MLP on the current row tile of X.
    # bf16 operands on the MXU, float32 accumulation via preferred_element_type.
    x = x_ref[...].astype(jnp.bfloat16)            # cast on-tile; no HBM copy of X
    h = jnp.dot(x, w1_ref[...], preferred_element_type=jnp.float32)
    h = jnp.maximum(h, 0.0).astype(jnp.bfloat16)   # ReLU (dropout = identity, eval mode)
    h = jnp.dot(h, w2_ref[...], preferred_element_type=jnp.float32)
    h = jnp.maximum(h, 0.0).astype(jnp.bfloat16)   # ReLU (dropout = identity, eval mode)
    out = jnp.dot(h, w3_ref[...], preferred_element_type=jnp.float32)
    o_ref[...] = out.astype(o_ref.dtype)


def prepare_pprgo_weights(w1, w2, w3, compute_dtype=jnp.bfloat16):
    """One-time weight prep — cache the results across forward calls.

    w1: [F, H], w2: [H, H], w3: [H, C]  ([in, out] layout).
    Output dims (H, C) are zero-padded to multiples of 128 (lane-dense MXU tiles); W1's
    input dim stays un-padded so it matches the un-padded X tile.  Zero-padded columns
    stay exactly zero through matmul + ReLU, so results are unaffected.
    """
    f, h = w1.shape
    c = w3.shape[1]
    h_pad = _round_up(h, 128)
    c_pad = _round_up(c, 128)
    w1_p = jnp.pad(w1.astype(compute_dtype), ((0, 0), (0, h_pad - h)))
    w2_p = jnp.pad(w2.astype(compute_dtype), ((0, h_pad - h), (0, h_pad - h)))
    w3_p = jnp.pad(w3.astype(compute_dtype), ((0, h_pad - h), (0, c_pad - c)))
    return w1_p, w2_p, w3_p


def _pick_row_tile(n, f, h_pad, c_pad, x_itemsize, out_itemsize, row_tile):
    """Largest row tile that keeps the double-buffered working set under budget."""
    if n <= row_tile:
        # Single block spanning all rows (block == full dim is always layout-legal).
        return n
    rt = row_tile
    while rt > 128:
        need = (
            2 * rt * f * x_itemsize                              # X, double-buffered
            + (f * h_pad + h_pad * h_pad + h_pad * c_pad) * 2    # bf16 weights (1 buffer)
            + 2 * rt * c_pad * out_itemsize                      # output, double-buffered
            + 2 * rt * h_pad * 4                                 # f32 intermediates (rough)
        )
        if need <= _VMEM_BUDGET_BYTES:
            break
        rt //= 2
    return rt


def _build_mlp_call(n, f, h_pad, c_pad, row_tile, out_dtype, single_buffer_weights):
    def w_spec(shape):
        if single_buffer_weights:
            # Grid-invariant weights: one VMEM buffer instead of two.
            return pl.BlockSpec(shape, lambda i: (0, 0), pipeline_mode=pl.Buffered(1))
        return pl.BlockSpec(shape, lambda i: (0, 0))

    return pl.pallas_call(
        _mlp_kernel,
        out_shape=jax.ShapeDtypeStruct((n, c_pad), out_dtype),
        grid=(pl.cdiv(n, row_tile),),
        in_specs=[
            # X tiled over rows; F is the full (un-padded) array dim -> legal block.
            pl.BlockSpec((row_tile, f), lambda i: (i, 0)),
            w_spec((f, h_pad)),
            w_spec((h_pad, h_pad)),
            w_spec((h_pad, c_pad)),
        ],
        # Lane-dense output block (c_pad is a multiple of 128 -> unmasked stores).
        out_specs=pl.BlockSpec((row_tile, c_pad), lambda i: (i, 0)),
        compiler_params=pltpu.CompilerParams(
            dimension_semantics=("parallel",),   # row axis shards across TCs (v7x megacore)
            vmem_limit_bytes=_VMEM_LIMIT_BYTES,
        ),
    )


def pprgo_mlp_forward(x, w1_p, w2_p, w3_p, num_classes, *, row_tile=512,
                      out_dtype=jnp.bfloat16):
    """x: [N, F] (any float dtype, un-padded); w*_p from prepare_pprgo_weights.

    Returns [N, num_classes] in out_dtype (bf16 default; pass jnp.float32 if the
    downstream consumer needs full precision).
    """
    n, f = x.shape
    h_pad = w1_p.shape[1]
    c_pad = w3_p.shape[1]
    rt = _pick_row_tile(n, f, h_pad, c_pad, x.dtype.itemsize,
                        jnp.dtype(out_dtype).itemsize, row_tile)
    try:
        call = _build_mlp_call(n, f, h_pad, c_pad, rt, out_dtype,
                               single_buffer_weights=True)
        out = call(x, w1_p, w2_p, w3_p)
    except Exception:
        # Fallback if this JAX build rejects pipeline_mode=pl.Buffered(1).
        call = _build_mlp_call(n, f, h_pad, c_pad, rt, out_dtype,
                               single_buffer_weights=False)
        out = call(x, w1_p, w2_p, w3_p)
    return out[:, :num_classes]


def _reference(x, w1, w2, w3):
    h = jnp.maximum(x @ w1, 0.0)
    h = jnp.maximum(h @ w2, 0.0)
    return h @ w3


if __name__ == "__main__":
    # Small shapes consistent with the module: nlayers=3, bias-free linears.
    num_nodes = 16        # batch of nodes (exercises the single-partial-block path)
    num_features = 32
    hidden_size = 32
    num_classes = 16

    key = jax.random.PRNGKey(0)
    kx, k1, k2, k3 = jax.random.split(key, 4)

    x = jax.random.normal(kx, (num_nodes, num_features), dtype=jnp.float32)

    # Deterministic Kaiming-uniform-ish init (nn.Linear default scale), [in, out] layout.
    def init_w(k, fan_in, fan_out):
        bound = 1.0 / jnp.sqrt(fan_in)
        return jax.random.uniform(k, (fan_in, fan_out), jnp.float32, -bound, bound)

    w1 = init_w(k1, num_features, hidden_size)
    w2 = init_w(k2, hidden_size, hidden_size)
    w3 = init_w(k3, hidden_size, num_classes)

    # One-time weight prep (bf16 + 128-padding), cached across calls in real serving.
    w1_p, w2_p, w3_p = prepare_pprgo_weights(w1, w2, w3)

    out = pprgo_mlp_forward(x, w1_p, w2_p, w3_p, num_classes)
    out = jax.block_until_ready(out)

    ref = _reference(x, w1, w2, w3)
    assert out.shape == (num_nodes, num_classes)
    # bf16 operands/output with f32 accumulation vs. full-f32 reference -> loose tolerance.
    assert jnp.allclose(out.astype(jnp.float32), ref, atol=5e-2, rtol=5e-2), \
        "mismatch vs reference"

    print("KERNEL_OK")
</pallas_src>

<mosaic_0001>
module attributes {stable_mosaic.version = 11 : i64} {
  func.func @_mlp_kernel(%arg0: i32, %arg1: memref<16x32xf32, #tpu.memory_space<vmem>>, %arg2: memref<32x128xbf16, #tpu.memory_space<vmem>>, %arg3: memref<128x128xbf16, #tpu.memory_space<vmem>>, %arg4: memref<128x128xbf16, #tpu.memory_space<vmem>>, %arg5: memref<16x128xbf16, #tpu.memory_space<vmem>>) attributes {dimension_semantics = [#tpu.dimension_semantics<parallel>], iteration_bounds = array<i64: 1>, scalar_prefetch = 0 : i64, scratch_operands = 0 : i64, tpu.core_type = #tpu.core_type<tc>, window_params = [{transform_indices = @transform_0, window_bounds = array<i64: 16, 32>}, {pipeline_mode = #tpu.pipeline_mode<synchronous>, transform_indices = @transform_1, window_bounds = array<i64: 32, 128>}, {pipeline_mode = #tpu.pipeline_mode<synchronous>, transform_indices = @transform_2, window_bounds = array<i64: 128, 128>}, {pipeline_mode = #tpu.pipeline_mode<synchronous>, transform_indices = @transform_3, window_bounds = array<i64: 128, 128>}, {transform_indices = @transform_4, window_bounds = array<i64: 16, 128>}]} {
    %c0 = arith.constant 0 : index
    %c0_0 = arith.constant 0 : index
    %0 = vector.load %arg1[%c0, %c0_0] : memref<16x32xf32, #tpu.memory_space<vmem>>, vector<16x32xf32>
    %1 = arith.truncf %0 : vector<16x32xf32> to vector<16x32xbf16>
    %c0_1 = arith.constant 0 : index
    %c0_2 = arith.constant 0 : index
    %2 = vector.load %arg2[%c0_1, %c0_2] : memref<32x128xbf16, #tpu.memory_space<vmem>>, vector<32x128xbf16>
    %cst = arith.constant dense<0.000000e+00> : vector<16x128xf32>
    %3 = tpu.matmul %1, %2, %cst {dimension_numbers = #tpu.dot_dimension_numbers<[1], [0], [0], [1], [0, 0, 1, 1], [], []>} : vector<16x32xbf16>, vector<32x128xbf16>, vector<16x128xf32> -> vector<16x128xf32>
    %cst_3 = arith.constant 0.000000e+00 : f32
    %4 = vector.broadcast %cst_3 : f32 to vector<16x128xf32>
    %5 = arith.maximumf %3, %4 : vector<16x128xf32>
    %6 = arith.truncf %5 : vector<16x128xf32> to vector<16x128xbf16>
    %c0_4 = arith.constant 0 : index
    %c0_5 = arith.constant 0 : index
    %7 = vector.load %arg3[%c0_4, %c0_5] : memref<128x128xbf16, #tpu.memory_space<vmem>>, vector<128x128xbf16>
    %cst_6 = arith.constant dense<0.000000e+00> : vector<16x128xf32>
    %8 = tpu.matmul %6, %7, %cst_6 {dimension_numbers = #tpu.dot_dimension_numbers<[1], [0], [0], [1], [0, 0, 1, 1], [], []>} : vector<16x128xbf16>, vector<128x128xbf16>, vector<16x128xf32> -> vector<16x128xf32>
    %cst_7 = arith.constant 0.000000e+00 : f32
    %9 = vector.broadcast %cst_7 : f32 to vector<16x128xf32>
    %10 = arith.maximumf %8, %9 : vector<16x128xf32>
    %11 = arith.truncf %10 : vector<16x128xf32> to vector<16x128xbf16>
    %c0_8 = arith.constant 0 : index
    %c0_9 = arith.constant 0 : index
    %12 = vector.load %arg4[%c0_8, %c0_9] : memref<128x128xbf16, #tpu.memory_space<vmem>>, vector<128x128xbf16>
    %cst_10 = arith.constant dense<0.000000e+00> : vector<16x128xf32>
    %13 = tpu.matmul %11, %12, %cst_10 {dimension_numbers = #tpu.dot_dimension_numbers<[1], [0], [0], [1], [0, 0, 1, 1], [], []>} : vector<16x128xbf16>, vector<128x128xbf16>, vector<16x128xf32> -> vector<16x128xf32>
    %14 = arith.truncf %13 : vector<16x128xf32> to vector<16x128xbf16>
    %c0_11 = arith.constant 0 : index
    %c0_12 = arith.constant 0 : index
    %15 = vector.load %arg5[%c0_11, %c0_12] : memref<16x128xbf16, #tpu.memory_space<vmem>>, vector<16x128xbf16>
    tpu.vector_store %arg5[%c0_11, %c0_12], %14 {strides = array<i32>} : memref<16x128xbf16, #tpu.memory_space<vmem>>, vector<16x128xbf16>,
    return
  }
  func.func @transform_0(%arg0: i32) -> (i32, i32) {
    %c0_i32 = arith.constant 0 : i32
    %c0_i32_0 = arith.constant 0 : i32
    return %arg0, %c0_i32 : i32, i32
  }
  func.func @transform_1(%arg0: i32) -> (i32, i32) {
    %c0_i32 = arith.constant 0 : i32
    %c0_i32_0 = arith.constant 0 : i32
    %c0_i32_1 = arith.constant 0 : i32
    return %c0_i32, %c0_i32_0 : i32, i32
  }
  func.func @transform_2(%arg0: i32) -> (i32, i32) {
    %c0_i32 = arith.constant 0 : i32
    %c0_i32_0 = arith.constant 0 : i32
    %c0_i32_1 = arith.constant 0 : i32
    return %c0_i32, %c0_i32_0 : i32, i32
  }
  func.func @transform_3(%arg0: i32) -> (i32, i32) {
    %c0_i32 = arith.constant 0 : i32
    %c0_i32_0 = arith.constant 0 : i32
    %c0_i32_1 = arith.constant 0 : i32
    return %c0_i32, %c0_i32_0 : i32, i32
  }
  func.func @transform_4(%arg0: i32) -> (i32, i32) {
    %c0_i32 = arith.constant 0 : i32
    %c0_i32_0 = arith.constant 0 : i32
    return %arg0, %c0_i32 : i32, i32
  }
}

module attributes {stable_mosaic.version = 11 : i64} {
  func.func @_mlp_kernel(%arg0: i32, %arg1: memref<16x32xf32, #tpu.memory_space<vmem>>, %arg2: memref<32x128xbf16, #tpu.memory_space<vmem>>, %arg3: memref<128x128xbf16, #tpu.memory_space<vmem>>, %arg4: memref<128x128xbf16, #tpu.memory_space<vmem>>, %arg5: memref<16x128xbf16, #tpu.memory_space<vmem>>) attributes {dimension_semantics = [#tpu.dimension_semantics<parallel>], iteration_bounds = array<i64: 1>, scalar_prefetch = 0 : i64, scratch_operands = 0 : i64, tpu.core_type = #tpu.core_type<tc>, window_params = [{transform_indices = @transform_0, window_bounds = array<i64: 16, 32>}, {pipeline_mode = #tpu.pipeline_mode<synchronous>, transform_indices = @transform_1, window_bounds = array<i64: 32, 128>}, {pipeline_mode = #tpu.pipeline_mode<synchronous>, transform_indices = @transform_2, window_bounds = array<i64: 128, 128>}, {pipeline_mode = #tpu.pipeline_mode<synchronous>, transform_indices = @transform_3, window_bounds = array<i64: 128, 128>}, {transform_indices = @transform_4, window_bounds = array<i64: 16, 128>}]} {
    %c0 = arith.constant 0 : index
    %c0_0 = arith.constant 0 : index
    %0 = vector.load %arg1[%c0, %c0_0] : memref<16x32xf32, #tpu.memory_space<vmem>>, vector<16x32xf32>
    %1 = arith.truncf %0 : vector<16x32xf32> to vector<16x32xbf16>
    %c0_1 = arith.constant 0 : index
    %c0_2 = arith.constant 0 : index
    %2 = vector.load %arg2[%c0_1, %c0_2] : memref<32x128xbf16, #tpu.memory_space<vmem>>, vector<32x128xbf16>
    %cst = arith.constant dense<0.000000e+00> : vector<16x128xf32>
    %3 = tpu.matmul %1, %2, %cst {dimension_numbers = #tpu.dot_dimension_numbers<[1], [0], [0], [1], [0, 0, 1, 1], [], []>} : vector<16x32xbf16>, vector<32x128xbf16>, vector<16x128xf32> -> vector<16x128xf32>
    %cst_3 = arith.constant 0.000000e+00 : f32
    %4 = vector.broadcast %cst_3 : f32 to vector<16x128xf32>
    %5 = arith.maximumf %3, %4 : vector<16x128xf32>
    %6 = arith.truncf %5 : vector<16x128xf32> to vector<16x128xbf16>
    %c0_4 = arith.constant 0 : index
    %c0_5 = arith.constant 0 : index
    %7 = vector.load %arg3[%c0_4, %c0_5] : memref<128x128xbf16, #tpu.memory_space<vmem>>, vector<128x128xbf16>
    %cst_6 = arith.constant dense<0.000000e+00> : vector<16x128xf32>
    %8 = tpu.matmul %6, %7, %cst_6 {dimension_numbers = #tpu.dot_dimension_numbers<[1], [0], [0], [1], [0, 0, 1, 1], [], []>} : vector<16x128xbf16>, vector<128x128xbf16>, vector<16x128xf32> -> vector<16x128xf32>
    %cst_7 = arith.constant 0.000000e+00 : f32
    %9 = vector.broadcast %cst_7 : f32 to vector<16x128xf32>
    %10 = arith.maximumf %8, %9 : vector<16x128xf32>
    %11 = arith.truncf %10 : vector<16x128xf32> to vector<16x128xbf16>
    %c0_8 = arith.constant 0 : index
    %c0_9 = arith.constant 0 : index
    %12 = vector.load %arg4[%c0_8, %c0_9] : memref<128x128xbf16, #tpu.memory_space<vmem>>, vector<128x128xbf16>
    %cst_10 = arith.constant dense<0.000000e+00> : vector<16x128xf32>
    %13 = tpu.matmul %11, %12, %cst_10 {dimension_numbers = #tpu.dot_dimension_numbers<[1], [0], [0], [1], [0, 0, 1, 1], [], []>} : vector<16x128xbf16>, vector<128x128xbf16>, vector<16x128xf32> -> vector<16x128xf32>
    %14 = arith.truncf %13 : vector<16x128xf32> to vector<16x128xbf16>
    %c0_11 = arith.constant 0 : index
    %c0_12 = arith.constant 0 : index
    %15 = vector.load %arg5[%c0_11, %c0_12] : memref<16x128xbf16, #tpu.memory_space<vmem>>, vector<16x128xbf16>
    tpu.vector_store %arg5[%c0_11, %c0_12], %14 {strides = array<i32>} : memref<16x128xbf16, #tpu.memory_space<vmem>>, vector<16x128xbf16>,
    return
  }
  func.func @transform_0(%arg0: i32) -> (i32, i32) {
    %c0_i32 = arith.constant 0 : i32
    %c0_i32_0 = arith.constant 0 : i32
    return %arg0, %c0_i32 : i32, i32
  }
  func.func @transform_1(%arg0: i32) -> (i32, i32) {
    %c0_i32 = arith.constant 0 : i32
    %c0_i32_0 = arith.constant 0 : i32
    %c0_i32_1 = arith.constant 0 : i32
    return %c0_i32, %c0_i32_0 : i32, i32
  }
  func.func @transform_2(%arg0: i32) -> (i32, i32) {
    %c0_i32 = arith.constant 0 : i32
    %c0_i32_0 = arith.constant 0 : i32
    %c0_i32_1 = arith.constant 0 : i32
    return %c0_i32, %c0_i32_0 : i32, i32
  }
  func.func @transform_3(%arg0: i32) -> (i32, i32) {
    %c0_i32 = arith.constant 0 : i32
    %c0_i32_0 = arith.constant 0 : i32
    %c0_i32_1 = arith.constant 0 : i32
    return %c0_i32, %c0_i32_0 : i32, i32
  }
  func.func @transform_4(%arg0: i32) -> (i32, i32) {
    %c0_i32 = arith.constant 0 : i32
    %c0_i32_0 = arith.constant 0 : i32
    return %arg0, %c0_i32 : i32, i32
  }
}

</mosaic_0001>

<llo_original>
// kernel: tpu_custom_call.1
$region0: #{tpu_custom_call.1}
  #allocation0 [shape = 'u32[]', space=smem, size = 0x4, offset = 0x4, fixed_abs, tag = 'smem constant byte address 0x4 - core index']
  #allocation1 [shape = 'u32[72,128]{1,0:T(1,128)}', space=vmem, size = 0x9000, scoped, tag = 'internal scratch']
  %s0 = inlined_call_operand.hbm [shape: f32[16,32], index: 0, kind: input, shape index: {}]
  %s1 = inlined_call_operand.hbm [shape: bf16[32,128], index: 1, kind: input, shape index: {}]
  %s2 = inlined_call_operand.hbm [shape: bf16[128,128], index: 2, kind: input, shape index: {}]
  %s3 = inlined_call_operand.hbm [shape: bf16[128,128], index: 3, kind: input, shape index: {}]
  %s4 = inlined_call_operand.hbm [shape: bf16[16,128], index: 4, kind: output, shape index: {}]
  %s5 = sld [smem:[#allocation0]]
  $region42: #{tpu_custom_call.1} parent=0
    _
  %s7 = ssub.s32 1, %s5
  %s8 = scalar_select 0, %s7, %s5
  $region1: #{tpu_custom_call.1} parent=0
    #allocation2 [shape = 'u8[8192]{0}', space=vmem, size = 0x2000, scoped, tag = 'input window, operand 0, single buffered']
    #allocation3 [shape = 's32[1]{0}', space=sflag, size = 0x4, scoped, tag = 'scoped memory for tpu_custom_call.1']
    #allocation4 [shape = 's32[1]{0}', space=sflag, size = 0x4, scoped, tag = 'scoped memory for tpu_custom_call.1']
    #allocation5 [shape = 'u8[8192]{0}', space=vmem, size = 0x2000, scoped, tag = 'input window, operand 1, single buffered']
    #allocation6 [shape = 's32[1]{0}', space=sflag, size = 0x4, scoped, tag = 'scoped memory for tpu_custom_call.1']
    #allocation7 [shape = 'u8[32768]{0}', space=vmem, size = 0x8000, scoped, tag = 'input window, operand 2, single buffered']
    #allocation8 [shape = 'u8[32768]{0}', space=vmem, size = 0x8000, scoped, tag = 'input window, operand 3, single buffered']
    #allocation9 [shape = 's32[1]{0}', space=sflag, size = 0x4, scoped, tag = 'scoped memory for tpu_custom_call.1']
    #allocation10 [shape = 'u8[4096]{0}', space=vmem, size = 0x1000, scoped, tag = 'output window, operand 0, single buffered']
    %9 = vsyncpa [#allocation3], 0
    %10 = vsyncpa [#allocation6], 0
    %11 = vsyncpa [#allocation9], 0
    %12 = vsyncpa [#allocation4], 0
    // Predicated region
    $region2: #{tpu_custom_call.1} parent=1 // pred_check
      _
    $region3: #{tpu_custom_call.1} parent=1 // pred_check_branch
      %14 = sbr.rel (0) target = $region5
    $region4: #{tpu_custom_call.1} parent=1 // pred_region
      %16 = vsyncadd [#allocation3], 0
      %s17 = sshll.u32 %s0, 4
      %s18 = int_to_ptr.hbm [resolvable:$true] %s17
      %s19 = sshll.u32 [#allocation2], 4
      %s20 = int_to_ptr.vmem [resolvable:$true] %s19
      %25 = dma.hbm_to_vmem [thread:$0]  %s18, 256, %s20, [#allocation3], 128, 128, 8
    $region5: #{tpu_custom_call.1} parent=1 // pred_fallthru
      _
    // Predicated region
    $region6: #{tpu_custom_call.1} parent=1 // pred_check
      _
    $region7: #{tpu_custom_call.1} parent=1 // pred_check_branch
      %27 = sbr.rel (0) target = $region9
    $region8: #{tpu_custom_call.1} parent=1 // pred_region
      %29 = vsyncadd [#allocation6], 0
      %s30 = sshll.u32 %s1, 4
      %s31 = int_to_ptr.hbm [resolvable:$true] %s30
      %s32 = sshll.u32 [#allocation5], 4
      %s33 = int_to_ptr.vmem [resolvable:$true] %s32
      %38 = dma.hbm_to_vmem [thread:$0]  %s31, 256, %s33, [#allocation6], 64, 64, 4
    $region9: #{tpu_custom_call.1} parent=1 // pred_fallthru
      _
    // Predicated region
    $region10: #{tpu_custom_call.1} parent=1 // pred_check
      _
    $region11: #{tpu_custom_call.1} parent=1 // pred_check_branch
      %40 = sbr.rel (0) target = $region13
    $region12: #{tpu_custom_call.1} parent=1 // pred_region
      %42 = vsyncadd [#allocation6], 0
      %s43 = sshll.u32 %s2, 4
      %s44 = int_to_ptr.hbm [resolvable:$true] %s43
      %s45 = sshll.u32 [#allocation7], 4
      %s46 = int_to_ptr.vmem [resolvable:$true] %s45
      %51 = dma.hbm_to_vmem [thread:$0]  %s44, 1024, %s46, [#allocation6], 64, 64, 4
    $region13: #{tpu_custom_call.1} parent=1 // pred_fallthru
      _
    // Predicated region
    $region14: #{tpu_custom_call.1} parent=1 // pred_check
      _
    $region15: #{tpu_custom_call.1} parent=1 // pred_check_branch
      %53 = sbr.rel (0) target = $region17
    $region16: #{tpu_custom_call.1} parent=1 // pred_region
      %55 = vsyncadd [#allocation9], 0
      %s56 = sshll.u32 %s3, 4
      %s57 = int_to_ptr.hbm [resolvable:$true] %s56
      %s58 = sshll.u32 [#allocation8], 4
      %s59 = int_to_ptr.vmem [resolvable:$true] %s58
      %64 = dma.hbm_to_vmem [thread:$0]  %s57, 1024, %s59, [#allocation9], 64, 64, 4
    $region17: #{tpu_custom_call.1} parent=1 // pred_fallthru
      _
    // Predicated region
    $region18: #{tpu_custom_call.1} parent=1 // pred_check
      _
    $region19: #{tpu_custom_call.1} parent=1 // pred_check_branch
      %66 = sbr.rel (0) target = $region21
    $region20: #{tpu_custom_call.1} parent=1 // pred_region
      %68 = dma.done [#allocation3], 256
    $region21: #{tpu_custom_call.1} parent=1 // pred_fallthru
      _
    // Predicated region
    $region22: #{tpu_custom_call.1} parent=1 // pred_check
      _
    $region23: #{tpu_custom_call.1} parent=1 // pred_check_branch
      %70 = sbr.rel (0) target = $region25
    $region24: #{tpu_custom_call.1} parent=1 // pred_region
      %72 = dma.done [#allocation6], 256
    $region25: #{tpu_custom_call.1} parent=1 // pred_fallthru
      _
    // Predicated region
    $region26: #{tpu_custom_call.1} parent=1 // pred_check
      _
    $region27: #{tpu_custom_call.1} parent=1 // pred_check_branch
      %74 = sbr.rel (0) target = $region29
    $region28: #{tpu_custom_call.1} parent=1 // pred_region
      %76 = dma.done [#allocation6], 1024
    $region29: #{tpu_custom_call.1} parent=1 // pred_fallthru
      _
    // Predicated region
    $region30: #{tpu_custom_call.1} parent=1 // pred_check
      _
    $region31: #{tpu_custom_call.1} parent=1 // pred_check_branch
      %78 = sbr.rel (0) target = $region33
    $region32: #{tpu_custom_call.1} parent=1 // pred_region
      %80 = dma.done [#allocation9], 1024
    $region33: #{tpu_custom_call.1} parent=1 // pred_fallthru
      _
    %v82 = vld [vmem:[#allocation2] sm:$0xff]
    %v83 = vld [vmem:[#allocation2 + $0x8] sm:$0xff]
    %v84 = vpack.c.bf16 %v83, %v82
    %v85 = vld [vmem:[#allocation5] sm:$0xf]
    %v86 = vld [vmem:[#allocation5 + $0x4] sm:$0xf]
    %v87 = vld [vmem:[#allocation5 + $0x8] sm:$0xf]
    %v88 = vld [vmem:[#allocation5 + $0xc] sm:$0xf]
    %v93 = vunpack.c.l.b16 %v85
    %v94 = vunpack.c.l.b16 %v86
    %v95 = vunpack.c.l.b16 %v87
    %v96 = vunpack.c.l.b16 %v88
    %v97 = vpack.c.b16 %v94, %v93
    %v98 = vpack.c.b16 %v96, %v95
    %vm101 = vcmask 261120
    %v103 = vsel %vm101, %v84, 0
    %105 = vmatpush.bf16.msra.mxu0 0
    %106 = vmatpush.bf16.msra.mxu0 0
    %107 = vmatpush.bf16.msra.mxu0 0
    %108 = vmatpush.bf16.msra.mxu0 0
    %109 = vmatpush.bf16.msra.mxu0 0
    %110 = vmatpush.bf16.msra.mxu0 0
    %111 = vmatpush.bf16.msra.mxu0 %v98
    %112 = vmatpush.bf16.msra.mxu0 %v97
    %113 = vmatmul.bf16.gmra.mxu0 %v103
    %v114 = vpop.f32.mrf.mxu0
    %v115 = vadd.f32 0.0, %v114
    %v116 = vpop.f32.mrf.mxu0
    %v117 = vadd.f32 0.0, %v116
    %118 = vdwg.mxu0
    %v119 = vmax.f32 %v115, 0.0
    %v120 = vmax.f32 %v117, 0.0
    %v121 = vpack.c.bf16 %v120, %v119
    %v122 = vld [vmem:[#allocation7] sm:$0xf]
    %v123 = vld [vmem:[#allocation7 + $0x4] sm:$0xf]
    %v124 = vld [vmem:[#allocation7 + $0x8] sm:$0xf]
    %v125 = vld [vmem:[#allocation7 + $0xc] sm:$0xf]
    %v126 = vld [vmem:[#allocation7 + $0x10] sm:$0xf]
    %v127 = vld [vmem:[#allocation7 + $0x14] sm:$0xf]
    %v128 = vld [vmem:[#allocation7 + $0x18] sm:$0xf]
    %v129 = vld [vmem:[#allocation7 + $0x1c] sm:$0xf]
    %v130 = vld [vmem:[#allocation7 + $0x20] sm:$0xf]
    %v131 = vld [vmem:[#allocation7 + $0x24] sm:$0xf]
    %v132 = vld [vmem:[#allocation7 + $0x28] sm:$0xf]
    %v133 = vld [vmem:[#allocation7 + $0x2c] sm:$0xf]
    %v134 = vld [vmem:[#allocation7 + $0x30] sm:$0xf]
    %v135 = vld [vmem:[#allocation7 + $0x34] sm:$0xf]
    %v136 = vld [vmem:[#allocation7 + $0x38] sm:$0xf]
    %v137 = vld [vmem:[#allocation7 + $0x3c] sm:$0xf]
    %v154 = vunpack.c.l.b16 %v122
    %v155 = vunpack.c.l.b16 %v123
    %v156 = vunpack.c.l.b16 %v124
    %v157 = vunpack.c.l.b16 %v125
    %v158 = vunpack.c.l.b16 %v126
    %v159 = vunpack.c.l.b16 %v127
    %v160 = vunpack.c.l.b16 %v128
    %v161 = vunpack.c.l.b16 %v129
    %v162 = vunpack.c.l.b16 %v130
    %v163 = vunpack.c.l.b16 %v131
    %v164 = vunpack.c.l.b16 %v132
    %v165 = vunpack.c.l.b16 %v133
    %v166 = vunpack.c.l.b16 %v134
    %v167 = vunpack.c.l.b16 %v135
    %v168 = vunpack.c.l.b16 %v136
    %v169 = vunpack.c.l.b16 %v137
    %v170 = vpack.c.b16 %v155, %v154
    %v171 = vpack.c.b16 %v157, %v156
    %v172 = vpack.c.b16 %v159, %v158
    %v173 = vpack.c.b16 %v161, %v160
    %v174 = vpack.c.b16 %v163, %v162
    %v175 = vpack.c.b16 %v165, %v164
    %v176 = vpack.c.b16 %v167, %v166
    %v177 = vpack.c.b16 %v169, %v168
    %186 = vmatpush.bf16.msra.mxu0 %v177
    %187 = vmatpush.bf16.msra.mxu0 %v176
    %188 = vmatpush.bf16.msra.mxu0 %v175
    %189 = vmatpush.bf16.msra.mxu0 %v174
    %190 = vmatpush.bf16.msra.mxu0 %v173
    %191 = vmatpush.bf16.msra.mxu0 %v172
    %192 = vmatpush.bf16.msra.mxu0 %v171
    %193 = vmatpush.bf16.msra.mxu0 %v170
    %194 = vmatmul.bf16.gmra.mxu0 %v121
    %v195 = vpop.f32.mrf.mxu0
    %v196 = vadd.f32 0.0, %v195
    %v197 = vpop.f32.mrf.mxu0
    %v198 = vadd.f32 0.0, %v197
    %199 = vdwg.mxu0
    %v200 = vmax.f32 %v196, 0.0
    %v201 = vmax.f32 %v198, 0.0
    %v202 = vpack.c.bf16 %v201, %v200
    %v203 = vld [vmem:[#allocation8] sm:$0xf]
    %v204 = vld [vmem:[#allocation8 + $0x4] sm:$0xf]
    %v205 = vld [vmem:[#allocation8 + $0x8] sm:$0xf]
    %v206 = vld [vmem:[#allocation8 + $0xc] sm:$0xf]
    %v207 = vld [vmem:[#allocation8 + $0x10] sm:$0xf]
    %v208 = vld [vmem:[#allocation8 + $0x14] sm:$0xf]
    %v209 = vld [vmem:[#allocation8 + $0x18] sm:$0xf]
    %v210 = vld [vmem:[#allocation8 + $0x1c] sm:$0xf]
    %v211 = vld [vmem:[#allocation8 + $0x20] sm:$0xf]
    %v212 = vld [vmem:[#allocation8 + $0x24] sm:$0xf]
    %v213 = vld [vmem:[#allocation8 + $0x28] sm:$0xf]
    %v214 = vld [vmem:[#allocation8 + $0x2c] sm:$0xf]
    %v215 = vld [vmem:[#allocation8 + $0x30] sm:$0xf]
    %v216 = vld [vmem:[#allocation8 + $0x34] sm:$0xf]
    %v217 = vld [vmem:[#allocation8 + $0x38] sm:$0xf]
    %v218 = vld [vmem:[#allocation8 + $0x3c] sm:$0xf]
    %v235 = vunpack.c.l.b16 %v203
    %v236 = vunpack.c.l.b16 %v204
    %v237 = vunpack.c.l.b16 %v205
    %v238 = vunpack.c.l.b16 %v206
    %v239 = vunpack.c.l.b16 %v207
    %v240 = vunpack.c.l.b16 %v208
    %v241 = vunpack.c.l.b16 %v209
    %v242 = vunpack.c.l.b16 %v210
    %v243 = vunpack.c.l.b16 %v211
    %v244 = vunpack.c.l.b16 %v212
    %v245 = vunpack.c.l.b16 %v213
    %v246 = vunpack.c.l.b16 %v214
    %v247 = vunpack.c.l.b16 %v215
    %v248 = vunpack.c.l.b16 %v216
    %v249 = vunpack.c.l.b16 %v217
    %v250 = vunpack.c.l.b16 %v218
    %v251 = vpack.c.b16 %v236, %v235
    %v252 = vpack.c.b16 %v238, %v237
    %v253 = vpack.c.b16 %v240, %v239
    %v254 = vpack.c.b16 %v242, %v241
    %v255 = vpack.c.b16 %v244, %v243
    %v256 = vpack.c.b16 %v246, %v245
    %v257 = vpack.c.b16 %v248, %v247
    %v258 = vpack.c.b16 %v250, %v249
    %267 = vmatpush.bf16.msra.mxu0 %v258
    %268 = vmatpush.bf16.msra.mxu0 %v257
    %269 = vmatpush.bf16.msra.mxu0 %v256
    %270 = vmatpush.bf16.msra.mxu0 %v255
    %271 = vmatpush.bf16.msra.mxu0 %v254
    %272 = vmatpush.bf16.msra.mxu0 %v253
    %273 = vmatpush.bf16.msra.mxu0 %v252
    %274 = vmatpush.bf16.msra.mxu0 %v251
    %275 = vmatmul.bf16.gmra.mxu0 %v202
    %v276 = vpop.f32.mrf.mxu0
    %v277 = vadd.f32 0.0, %v276
    %v278 = vpop.f32.mrf.mxu0
    %v279 = vadd.f32 0.0, %v278
    %280 = vdwg.mxu0
    %v281 = vpack.c.bf16 %v277, %v277
    %v282 = vpack.c.bf16 %v279, %v279
    %283 = vst [vmem:[#allocation10] sm:$0xf] %v281
    %284 = vst [vmem:[#allocation10 + $0x4] sm:$0xf] %v282
    // Predicated region
    $region34: #{tpu_custom_call.1} parent=1 // pred_check
      _
    $region35: #{tpu_custom_call.1} parent=1 // pred_check_branch
      %286 = sbr.rel (0) target = $region37
    $region36: #{tpu_custom_call.1} parent=1 // pred_region
      %288 = vsyncadd [#allocation4], 0
      %s289 = sshll.u32 [#allocation10], 4
      %s290 = int_to_ptr.vmem [resolvable:$true] %s289
      %s291 = sshll.u32 %s4, 4
      %s292 = int_to_ptr.hbm [resolvable:$true] %s291
      %297 = dma.vmem_to_hbm [thread:$0]  %s290, 128, %s292, [#allocation4], 64, 64, 4
    $region37: #{tpu_custom_call.1} parent=1 // pred_fallthru
      _
    // Predicated region
    $region38: #{tpu_custom_call.1} parent=1 // pred_check
      _
    $region39: #{tpu_custom_call.1} parent=1 // pred_check_branch
      %299 = sbr.rel (0) target = $region41
    $region40: #{tpu_custom_call.1} parent=1 // pred_region
      %301 = dma.done [#allocation4], 128
    $region41: #{tpu_custom_call.1} parent=1 // pred_fallthru
      _
    %302 = vsyncpa [#allocation3], 1
    %303 = vsyncpa [#allocation6], 1
    %304 = vsyncpa [#allocation9], 1
    %305 = vsyncpa [#allocation4], 1

// kernel: tpu_custom_call.1
$region0: #{tpu_custom_call.1}
  #allocation0 [shape = 'u32[]', space=smem, size = 0x4, offset = 0x4, fixed_abs, tag = 'smem constant byte address 0x4 - core index']
  #allocation1 [shape = 'u32[72,128]{1,0:T(1,128)}', space=vmem, size = 0x9000, scoped, tag = 'internal scratch']
  %s0 = inlined_call_operand.hbm [shape: f32[16,32], index: 0, kind: input, shape index: {}]
  %s1 = inlined_call_operand.hbm [shape: bf16[32,128], index: 1, kind: input, shape index: {}]
  %s2 = inlined_call_operand.hbm [shape: bf16[128,128], index: 2, kind: input, shape index: {}]
  %s3 = inlined_call_operand.hbm [shape: bf16[128,128], index: 3, kind: input, shape index: {}]
  %s4 = inlined_call_operand.hbm [shape: bf16[16,128], index: 4, kind: output, shape index: {}]
  %s5 = sld [smem:[#allocation0]]
  $region42: #{tpu_custom_call.1} parent=0
    _
  %s7 = ssub.s32 1, %s5
  %s8 = scalar_select 0, %s7, %s5
  $region1: #{tpu_custom_call.1} parent=0
    #allocation2 [shape = 'u8[8192]{0}', space=vmem, size = 0x2000, scoped, tag = 'input window, operand 0, single buffered']
    #allocation3 [shape = 's32[1]{0}', space=sflag, size = 0x4, scoped, tag = 'scoped memory for tpu_custom_call.1']
    #allocation4 [shape = 's32[1]{0}', space=sflag, size = 0x4, scoped, tag = 'scoped memory for tpu_custom_call.1']
    #allocation5 [shape = 'u8[8192]{0}', space=vmem, size = 0x2000, scoped, tag = 'input window, operand 1, single buffered']
    #allocation6 [shape = 's32[1]{0}', space=sflag, size = 0x4, scoped, tag = 'scoped memory for tpu_custom_call.1']
    #allocation7 [shape = 'u8[32768]{0}', space=vmem, size = 0x8000, scoped, tag = 'input window, operand 2, single buffered']
    #allocation8 [shape = 'u8[32768]{0}', space=vmem, size = 0x8000, scoped, tag = 'input window, operand 3, single buffered']
    #allocation9 [shape = 's32[1]{0}', space=sflag, size = 0x4, scoped, tag = 'scoped memory for tpu_custom_call.1']
    #allocation10 [shape = 'u8[4096]{0}', space=vmem, size = 0x1000, scoped, tag = 'output window, operand 0, single buffered']
    %9 = vsyncpa [#allocation3], 0
    %10 = vsyncpa [#allocation6], 0
    %11 = vsyncpa [#allocation9], 0
    %12 = vsyncpa [#allocation4], 0
    // Predicated region
    $region2: #{tpu_custom_call.1} parent=1 // pred_check
      _
    $region3: #{tpu_custom_call.1} parent=1 // pred_check_branch
      %14 = sbr.rel (0) target = $region5
    $region4: #{tpu_custom_call.1} parent=1 // pred_region
      %16 = vsyncadd [#allocation3], 0
      %s17 = sshll.u32 %s0, 4
      %s18 = int_to_ptr.hbm [resolvable:$true] %s17
      %s19 = sshll.u32 [#allocation2], 4
      %s20 = int_to_ptr.vmem [resolvable:$true] %s19
      %25 = dma.hbm_to_vmem [thread:$0]  %s18, 256, %s20, [#allocation3], 128, 128, 8
    $region5: #{tpu_custom_call.1} parent=1 // pred_fallthru
      _
    // Predicated region
    $region6: #{tpu_custom_call.1} parent=1 // pred_check
      _
    $region7: #{tpu_custom_call.1} parent=1 // pred_check_branch
      %27 = sbr.rel (0) target = $region9
    $region8: #{tpu_custom_call.1} parent=1 // pred_region
      %29 = vsyncadd [#allocation6], 0
      %s30 = sshll.u32 %s1, 4
      %s31 = int_to_ptr.hbm [resolvable:$true] %s30
      %s32 = sshll.u32 [#allocation5], 4
      %s33 = int_to_ptr.vmem [resolvable:$true] %s32
      %38 = dma.hbm_to_vmem [thread:$0]  %s31, 256, %s33, [#allocation6], 64, 64, 4
    $region9: #{tpu_custom_call.1} parent=1 // pred_fallthru
      _
    // Predicated region
    $region10: #{tpu_custom_call.1} parent=1 // pred_check
      _
    $region11: #{tpu_custom_call.1} parent=1 // pred_check_branch
      %40 = sbr.rel (0) target = $region13
    $region12: #{tpu_custom_call.1} parent=1 // pred_region
      %42 = vsyncadd [#allocation6], 0
      %s43 = sshll.u32 %s2, 4
      %s44 = int_to_ptr.hbm [resolvable:$true] %s43
      %s45 = sshll.u32 [#allocation7], 4
      %s46 = int_to_ptr.vmem [resolvable:$true] %s45
      %51 = dma.hbm_to_vmem [thread:$0]  %s44, 1024, %s46, [#allocation6], 64, 64, 4
    $region13: #{tpu_custom_call.1} parent=1 // pred_fallthru
      _
    // Predicated region
    $region14: #{tpu_custom_call.1} parent=1 // pred_check
      _
    $region15: #{tpu_custom_call.1} parent=1 // pred_check_branch
      %53 = sbr.rel (0) target = $region17
    $region16: #{tpu_custom_call.1} parent=1 // pred_region
      %55 = vsyncadd [#allocation9], 0
      %s56 = sshll.u32 %s3, 4
      %s57 = int_to_ptr.hbm [resolvable:$true] %s56
      %s58 = sshll.u32 [#allocation8], 4
      %s59 = int_to_ptr.vmem [resolvable:$true] %s58
      %64 = dma.hbm_to_vmem [thread:$0]  %s57, 1024, %s59, [#allocation9], 64, 64, 4
    $region17: #{tpu_custom_call.1} parent=1 // pred_fallthru
      _
    // Predicated region
    $region18: #{tpu_custom_call.1} parent=1 // pred_check
      _
    $region19: #{tpu_custom_call.1} parent=1 // pred_check_branch
      %66 = sbr.rel (0) target = $region21
    $region20: #{tpu_custom_call.1} parent=1 // pred_region
      %68 = dma.done [#allocation3], 256
    $region21: #{tpu_custom_call.1} parent=1 // pred_fallthru
      _
    // Predicated region
    $region22: #{tpu_custom_call.1} parent=1 // pred_check
      _
    $region23: #{tpu_custom_call.1} parent=1 // pred_check_branch
      %70 = sbr.rel (0) target = $region25
    $region24: #{tpu_custom_call.1} parent=1 // pred_region
      %72 = dma.done [#allocation6], 256
    $region25: #{tpu_custom_call.1} parent=1 // pred_fallthru
      _
    // Predicated region
    $region26: #{tpu_custom_call.1} parent=1 // pred_check
      _
    $region27: #{tpu_custom_call.1} parent=1 // pred_check_branch
      %74 = sbr.rel (0) target = $region29
    $region28: #{tpu_custom_call.1} parent=1 // pred_region
      %76 = dma.done [#allocation6], 1024
    $region29: #{tpu_custom_call.1} parent=1 // pred_fallthru
      _
    // Predicated region
    $region30: #{tpu_custom_call.1} parent=1 // pred_check
      _
    $region31: #{tpu_custom_call.1} parent=1 // pred_check_branch
      %78 = sbr.rel (0) target = $region33
    $region32: #{tpu_custom_call.1} parent=1 // pred_region
      %80 = dma.done [#allocation9], 1024
    $region33: #{tpu_custom_call.1} parent=1 // pred_fallthru
      _
    %v82 = vld [vmem:[#allocation2] sm:$0xff]
    %v83 = vld [vmem:[#allocation2 + $0x8] sm:$0xff]
    %v84 = vpack.c.bf16 %v83, %v82
    %v85 = vld [vmem:[#allocation5] sm:$0xf]
    %v86 = vld [vmem:[#allocation5 + $0x4] sm:$0xf]
    %v87 = vld [vmem:[#allocation5 + $0x8] sm:$0xf]
    %v88 = vld [vmem:[#allocation5 + $0xc] sm:$0xf]
    %v93 = vunpack.c.l.b16 %v85
    %v94 = vunpack.c.l.b16 %v86
    %v95 = vunpack.c.l.b16 %v87
    %v96 = vunpack.c.l.b16 %v88
    %v97 = vpack.c.b16 %v94, %v93
    %v98 = vpack.c.b16 %v96, %v95
    %vm101 = vcmask 261120
    %v103 = vsel %vm101, %v84, 0
    %105 = vmatpush.bf16.msra.mxu0 0
    %106 = vmatpush.bf16.msra.mxu0 0
    %107 = vmatpush.bf16.msra.mxu0 0
    %108 = vmatpush.bf16.msra.mxu0 0
    %109 = vmatpush.bf16.msra.mxu0 0
    %110 = vmatpush.bf16.msra.mxu0 0
    %111 = vmatpush.bf16.msra.mxu0 %v98
    %112 = vmatpush.bf16.msra.mxu0 %v97
    %113 = vmatmul.bf16.gmra.mxu0 %v103
    %v114 = vpop.f32.mrf.mxu0
    %v115 = vadd.f32 0.0, %v114
    %v116 = vpop.f32.mrf.mxu0
    %v117 = vadd.f32 0.0, %v116
    %118 = vdwg.mxu0
    %v119 = vmax.f32 %v115, 0.0
    %v120 = vmax.f32 %v117, 0.0
    %v121 = vpack.c.bf16 %v120, %v119
    %v122 = vld [vmem:[#allocation7] sm:$0xf]
    %v123 = vld [vmem:[#allocation7 + $0x4] sm:$0xf]
    %v124 = vld [vmem:[#allocation7 + $0x8] sm:$0xf]
    %v125 = vld [vmem:[#allocation7 + $0xc] sm:$0xf]
    %v126 = vld [vmem:[#allocation7 + $0x10] sm:$0xf]
    %v127 = vld [vmem:[#allocation7 + $0x14] sm:$0xf]
    %v128 = vld [vmem:[#allocation7 + $0x18] sm:$0xf]
    %v129 = vld [vmem:[#allocation7 + $0x1c] sm:$0xf]
    %v130 = vld [vmem:[#allocation7 + $0x20] sm:$0xf]
    %v131 = vld [vmem:[#allocation7 + $0x24] sm:$0xf]
    %v132 = vld [vmem:[#allocation7 + $0x28] sm:$0xf]
    %v133 = vld [vmem:[#allocation7 + $0x2c] sm:$0xf]
    %v134 = vld [vmem:[#allocation7 + $0x30] sm:$0xf]
    %v135 = vld [vmem:[#allocation7 + $0x34] sm:$0xf]
    %v136 = vld [vmem:[#allocation7 + $0x38] sm:$0xf]
    %v137 = vld [vmem:[#allocation7 + $0x3c] sm:$0xf]
    %v154 = vunpack.c.l.b16 %v122
    %v155 = vunpack.c.l.b16 %v123
    %v156 = vunpack.c.l.b16 %v124
    %v157 = vunpack.c.l.b16 %v125
    %v158 = vunpack.c.l.b16 %v126
    %v159 = vunpack.c.l.b16 %v127
    %v160 = vunpack.c.l.b16 %v128
    %v161 = vunpack.c.l.b16 %v129
    %v162 = vunpack.c.l.b16 %v130
    %v163 = vunpack.c.l.b16 %v131
    %v164 = vunpack.c.l.b16 %v132
    %v165 = vunpack.c.l.b16 %v133
    %v166 = vunpack.c.l.b16 %v134
    %v167 = vunpack.c.l.b16 %v135
    %v168 = vunpack.c.l.b16 %v136
    %v169 = vunpack.c.l.b16 %v137
    %v170 = vpack.c.b16 %v155, %v154
    %v171 = vpack.c.b16 %v157, %v156
    %v172 = vpack.c.b16 %v159, %v158
    %v173 = vpack.c.b16 %v161, %v160
    %v174 = vpack.c.b16 %v163, %v162
    %v175 = vpack.c.b16 %v165, %v164
    %v176 = vpack.c.b16 %v167, %v166
    %v177 = vpack.c.b16 %v169, %v168
    %186 = vmatpush.bf16.msra.mxu0 %v177
    %187 = vmatpush.bf16.msra.mxu0 %v176
    %188 = vmatpush.bf16.msra.mxu0 %v175
    %189 = vmatpush.bf16.msra.mxu0 %v174
    %190 = vmatpush.bf16.msra.mxu0 %v173
    %191 = vmatpush.bf16.msra.mxu0 %v172
    %192 = vmatpush.bf16.msra.mxu0 %v171
    %193 = vmatpush.bf16.msra.mxu0 %v170
    %194 = vmatmul.bf16.gmra.mxu0 %v121
    %v195 = vpop.f32.mrf.mxu0
    %v196 = vadd.f32 0.0, %v195
    %v197 = vpop.f32.mrf.mxu0
    %v198 = vadd.f32 0.0, %v197
    %199 = vdwg.mxu0
    %v200 = vmax.f32 %v196, 0.0
    %v201 = vmax.f32 %v198, 0.0
    %v202 = vpack.c.bf16 %v201, %v200
    %v203 = vld [vmem:[#allocation8] sm:$0xf]
    %v204 = vld [vmem:[#allocation8 + $0x4] sm:$0xf]
    %v205 = vld [vmem:[#allocation8 + $0x8] sm:$0xf]
    %v206 = vld [vmem:[#allocation8 + $0xc] sm:$0xf]
    %v207 = vld [vmem:[#allocation8 + $0x10] sm:$0xf]
    %v208 = vld [vmem:[#allocation8 + $0x14] sm:$0xf]
    %v209 = vld [vmem:[#allocation8 + $0x18] sm:$0xf]
    %v210 = vld [vmem:[#allocation8 + $0x1c] sm:$0xf]
    %v211 = vld [vmem:[#allocation8 + $0x20] sm:$0xf]
    %v212 = vld [vmem:[#allocation8 + $0x24] sm:$0xf]
    %v213 = vld [vmem:[#allocation8 + $0x28] sm:$0xf]
    %v214 = vld [vmem:[#allocation8 + $0x2c] sm:$0xf]
    %v215 = vld [vmem:[#allocation8 + $0x30] sm:$0xf]
    %v216 = vld [vmem:[#allocation8 + $0x34] sm:$0xf]
    %v217 = vld [vmem:[#allocation8 + $0x38] sm:$0xf]
    %v218 = vld [vmem:[#allocation8 + $0x3c] sm:$0xf]
    %v235 = vunpack.c.l.b16 %v203
    %v236 = vunpack.c.l.b16 %v204
    %v237 = vunpack.c.l.b16 %v205
    %v238 = vunpack.c.l.b16 %v206
    %v239 = vunpack.c.l.b16 %v207
    %v240 = vunpack.c.l.b16 %v208
    %v241 = vunpack.c.l.b16 %v209
    %v242 = vunpack.c.l.b16 %v210
    %v243 = vunpack.c.l.b16 %v211
    %v244 = vunpack.c.l.b16 %v212
    %v245 = vunpack.c.l.b16 %v213
    %v246 = vunpack.c.l.b16 %v214
    %v247 = vunpack.c.l.b16 %v215
    %v248 = vunpack.c.l.b16 %v216
    %v249 = vunpack.c.l.b16 %v217
    %v250 = vunpack.c.l.b16 %v218
    %v251 = vpack.c.b16 %v236, %v235
    %v252 = vpack.c.b16 %v238, %v237
    %v253 = vpack.c.b16 %v240, %v239
    %v254 = vpack.c.b16 %v242, %v241
    %v255 = vpack.c.b16 %v244, %v243
    %v256 = vpack.c.b16 %v246, %v245
    %v257 = vpack.c.b16 %v248, %v247
    %v258 = vpack.c.b16 %v250, %v249
    %267 = vmatpush.bf16.msra.mxu0 %v258
    %268 = vmatpush.bf16.msra.mxu0 %v257
    %269 = vmatpush.bf16.msra.mxu0 %v256
    %270 = vmatpush.bf16.msra.mxu0 %v255
    %271 = vmatpush.bf16.msra.mxu0 %v254
    %272 = vmatpush.bf16.msra.mxu0 %v253
    %273 = vmatpush.bf16.msra.mxu0 %v252
    %274 = vmatpush.bf16.msra.mxu0 %v251
    %275 = vmatmul.bf16.gmra.mxu0 %v202
    %v276 = vpop.f32.mrf.mxu0
    %v277 = vadd.f32 0.0, %v276
    %v278 = vpop.f32.mrf.mxu0
    %v279 = vadd.f32 0.0, %v278
    %280 = vdwg.mxu0
    %v281 = vpack.c.bf16 %v277, %v277
    %v282 = vpack.c.bf16 %v279, %v279
    %283 = vst [vmem:[#allocation10] sm:$0xf] %v281
    %284 = vst [vmem:[#allocation10 + $0x4] sm:$0xf] %v282
    // Predicated region
    $region34: #{tpu_custom_call.1} parent=1 // pred_check
      _
    $region35: #{tpu_custom_call.1} parent=1 // pred_check_branch
      %286 = sbr.rel (0) target = $region37
    $region36: #{tpu_custom_call.1} parent=1 // pred_region
      %288 = vsyncadd [#allocation4], 0
      %s289 = sshll.u32 [#allocation10], 4
      %s290 = int_to_ptr.vmem [resolvable:$true] %s289
      %s291 = sshll.u32 %s4, 4
      %s292 = int_to_ptr.hbm [resolvable:$true] %s291
      %297 = dma.vmem_to_hbm [thread:$0]  %s290, 128, %s292, [#allocation4], 64, 64, 4
    $region37: #{tpu_custom_call.1} parent=1 // pred_fallthru
      _
    // Predicated region
    $region38: #{tpu_custom_call.1} parent=1 // pred_check
      _
    $region39: #{tpu_custom_call.1} parent=1 // pred_check_branch
      %299 = sbr.rel (0) target = $region41
    $region40: #{tpu_custom_call.1} parent=1 // pred_region
      %301 = dma.done [#allocation4], 128
    $region41: #{tpu_custom_call.1} parent=1 // pred_fallthru
      _
    %302 = vsyncpa [#allocation3], 1
    %303 = vsyncpa [#allocation6], 1
    %304 = vsyncpa [#allocation9], 1
    %305 = vsyncpa [#allocation4], 1

</llo_original>
